<compile_context>
chip_gen: v6e
topology: v6e:2x2x1
jax: 0.10.0
libtpu: 0.0.40
codegen_flags: <defaults>
</compile_context>

<pallas_src>
import math
import numpy as np

import jax
import jax.numpy as jnp
from jax.experimental import pallas as pl
from jax.experimental.pallas import tpu as pltpu


def _round_up(a, b):
    return ((a + b - 1) // b) * b


def _pos_embed_kernel(coord_ref, const_ref, out_ref):
    # coord_ref: (rows, 2)   -- rows on sublanes, [y, x] on lanes
    # const_ref: (8, 2F)     -- row 0: y lane-coeffs, row 1: x lane-coeffs,
    #                           row 2: phase (pi/2 on cos lanes), rows 3..7: 0
    # out_ref:   (rows, 2F)
    y = coord_ref[:, 0:1]                      # (rows, 1)
    x = coord_ref[:, 1:2]                      # (rows, 1)
    cy = const_ref[0:1, :]                     # (1, 2F)
    cx = const_ref[1:2, :]                     # (1, 2F)
    ph = const_ref[2:3, :]                     # (1, 2F)
    # Two FMAs + one transcendental per element.  Phase = pi/2 on odd lanes
    # turns sin into cos, reproducing the interleaved sin/cos channels.
    p = y * cy + x * cx + ph                   # (rows, 2F)
    out_ref[...] = jnp.sin(p).astype(out_ref.dtype)


def position_embedding_sine(x, *, num_pos_feats=64, temperature=10000,
                            normalize=False, scale=None,
                            out_dtype=jnp.float32):
    """x: (B, N, 2) float -> (B, N, 2*num_pos_feats) of dtype `out_dtype`."""
    if scale is not None and normalize is False:
        raise ValueError('normalize should be True if scale is passed')
    if scale is None:
        scale = 2 * math.pi
    scale_mul = float(scale) if normalize else 1.0

    B, N, C = x.shape
    assert C == 2
    F = int(num_pos_feats)
    twoF = 2 * F

    # ---- host-side (trace-time) per-lane constants, fused into one array ----
    d = np.arange(F, dtype=np.float64)
    dim_t = np.asarray(temperature, dtype=np.float64) ** (2.0 * np.floor(d / 2.0) / F)
    inv = 1.0 / dim_t                                        # (F,)
    inv_full = np.concatenate([inv, inv])                    # (2F,)
    lane = np.arange(twoF)
    cy = np.where(lane < F, inv_full, 0.0) * scale_mul       # y -> lanes [0, F)
    cx = np.where(lane >= F, inv_full, 0.0) * scale_mul      # x -> lanes [F, 2F)
    parity = (lane % F) % 2
    phase = np.where(parity == 1, math.pi / 2.0, 0.0)        # sin(p + pi/2) == cos(p)

    const = np.zeros((8, twoF), dtype=np.float32)            # 8 sublanes, one DMA stream
    const[0, :] = cy
    const[1, :] = cx
    const[2, :] = phase
    const = jnp.asarray(const)

    # ---- flatten to a 2D row problem and tile rows --------------------------
    total_rows = B * N
    coords = x.reshape(total_rows, 2).astype(jnp.float32)    # rows on sublanes

    # Big tiles to amortize per-step overhead (~0.35us) and hit the HBM-write
    # roofline, but keep >= ~8 programs so v7x's two TensorCores both get work.
    MAX_TILE_ROWS = 2048
    MIN_PROGRAMS = 8
    tile_rows = max(8, min(MAX_TILE_ROWS,
                           _round_up(pl.cdiv(total_rows, MIN_PROGRAMS), 8)))
    grid = (pl.cdiv(total_rows, tile_rows),)                 # partial last block OK

    out = pl.pallas_call(
        _pos_embed_kernel,
        out_shape=jax.ShapeDtypeStruct((total_rows, twoF), out_dtype),
        grid_spec=pltpu.PrefetchScalarGridSpec(
            num_scalar_prefetch=0,
            grid=grid,
            in_specs=[
                pl.BlockSpec((tile_rows, 2), lambda i: (i, 0)),
                pl.BlockSpec((8, twoF), lambda i: (0, 0)),
            ],
            out_specs=pl.BlockSpec((tile_rows, twoF), lambda i: (i, 0)),
        ),
        compiler_params=pltpu.CompilerParams(
            dimension_semantics=("parallel",)),
    )(coords, const)

    return out.reshape(B, N, twoF)


def _reference(x, num_pos_feats=64, temperature=10000, normalize=False, scale=None):
    """Pure-JAX transcription of the PyTorch forward, for verification."""
    if scale is None:
        scale = 2 * math.pi
    y_embed = x[:, :, 0]
    x_embed = x[:, :, 1]
    if normalize:
        y_embed = y_embed * scale
        x_embed = x_embed * scale
    dim_t = jnp.arange(num_pos_feats, dtype=jnp.float32)
    dim_t = temperature ** (2.0 * (dim_t // 2) / num_pos_feats)
    pos_x = x_embed[:, :, None] / dim_t
    pos_y = y_embed[:, :, None] / dim_t
    pos_x = jnp.stack((jnp.sin(pos_x[:, :, 0::2]), jnp.cos(pos_x[:, :, 1::2])),
                      axis=3).reshape(x.shape[0], x.shape[1], -1)
    pos_y = jnp.stack((jnp.sin(pos_y[:, :, 0::2]), jnp.cos(pos_y[:, :, 1::2])),
                      axis=3).reshape(x.shape[0], x.shape[1], -1)
    return jnp.concatenate((pos_y, pos_x), axis=2)


if __name__ == "__main__":
    key = jax.random.PRNGKey(0)
    num_pos_feats = 64  # module default -> output channel dim 128 (lane-dense)

    # --- main check: f32, tile-aligned shape --------------------------------
    B, N = 2, 16
    x = jax.random.uniform(key, (B, N, 2), dtype=jnp.float32)
    out = jax.block_until_ready(position_embedding_sine(x, num_pos_feats=num_pos_feats))
    ref = _reference(x, num_pos_feats=num_pos_feats)
    assert out.shape == (B, N, 2 * num_pos_feats), out.shape
    assert jnp.allclose(out, ref, atol=1e-5, rtol=1e-5), float(jnp.max(jnp.abs(out - ref)))

    # --- edge check: row count not a multiple of the tile (partial last block)
    B2, N2 = 2, 37
    x2 = jax.random.uniform(jax.random.PRNGKey(1), (B2, N2, 2), dtype=jnp.float32)
    out2 = jax.block_until_ready(
        position_embedding_sine(x2, num_pos_feats=num_pos_feats, normalize=True))
    ref2 = _reference(x2, num_pos_feats=num_pos_feats, normalize=True)
    assert out2.shape == (B2, N2, 2 * num_pos_feats), out2.shape
    assert jnp.allclose(out2, ref2, atol=1e-5, rtol=1e-5), float(jnp.max(jnp.abs(out2 - ref2)))

    # --- optional bf16 output path (halves HBM write bytes; looser numerics) -
    out_bf16 = jax.block_until_ready(
        position_embedding_sine(x, num_pos_feats=num_pos_feats, out_dtype=jnp.bfloat16))
    assert out_bf16.dtype == jnp.bfloat16
    assert jnp.allclose(out_bf16.astype(jnp.float32), ref, atol=1.5e-2), \
        float(jnp.max(jnp.abs(out_bf16.astype(jnp.float32) - ref)))

    print("KERNEL_OK")
</pallas_src>

<mosaic_0001>
module attributes {stable_mosaic.version = 11 : i64} {
  func.func @_pos_embed_kernel(%arg0: i32, %arg1: memref<8x2xf32, #tpu.memory_space<vmem>>, %arg2: memref<8x128xf32, #tpu.memory_space<vmem>>, %arg3: memref<8x128xf32, #tpu.memory_space<vmem>>) attributes {dimension_semantics = [#tpu.dimension_semantics<parallel>], iteration_bounds = array<i64: 4>, scalar_prefetch = 0 : i64, scratch_operands = 0 : i64, tpu.core_type = #tpu.core_type<tc>, window_params = [{transform_indices = @transform_0, window_bounds = array<i64: 8, 2>}, {pipeline_mode = #tpu.pipeline_mode<synchronous>, transform_indices = @transform_1, window_bounds = array<i64: 8, 128>}, {transform_indices = @transform_2, window_bounds = array<i64: 8, 128>}]} {
    %c0 = arith.constant 0 : index
    %c0_0 = arith.constant 0 : index
    %0 = vector.load %arg1[%c0, %c0_0] : memref<8x2xf32, #tpu.memory_space<vmem>>, vector<8x1xf32>
    %c0_1 = arith.constant 0 : index
    %c1 = arith.constant 1 : index
    %1 = vector.load %arg1[%c0_1, %c1] : memref<8x2xf32, #tpu.memory_space<vmem>>, vector<8x1xf32>
    %c0_2 = arith.constant 0 : index
    %c0_3 = arith.constant 0 : index
    %2 = vector.load %arg2[%c0_2, %c0_3] : memref<8x128xf32, #tpu.memory_space<vmem>>, vector<1x128xf32>
    %c1_4 = arith.constant 1 : index
    %c0_5 = arith.constant 0 : index
    %3 = vector.load %arg2[%c1_4, %c0_5] : memref<8x128xf32, #tpu.memory_space<vmem>>, vector<1x128xf32>
    %c2 = arith.constant 2 : index
    %c0_6 = arith.constant 0 : index
    %4 = vector.load %arg2[%c2, %c0_6] : memref<8x128xf32, #tpu.memory_space<vmem>>, vector<1x128xf32>
    %5 = vector.broadcast %0 : vector<8x1xf32> to vector<8x128xf32>
    %6 = vector.broadcast %2 : vector<1x128xf32> to vector<8x128xf32>
    %7 = arith.mulf %5, %6 : vector<8x128xf32>
    %8 = vector.broadcast %1 : vector<8x1xf32> to vector<8x128xf32>
    %9 = vector.broadcast %3 : vector<1x128xf32> to vector<8x128xf32>
    %10 = arith.mulf %8, %9 : vector<8x128xf32>
    %11 = arith.addf %7, %10 : vector<8x128xf32>
    %12 = vector.broadcast %4 : vector<1x128xf32> to vector<8x128xf32>
    %13 = arith.addf %11, %12 : vector<8x128xf32>
    %14 = math.sin %13 : vector<8x128xf32>
    %c0_7 = arith.constant 0 : index
    %c0_8 = arith.constant 0 : index
    %15 = vector.load %arg3[%c0_7, %c0_8] : memref<8x128xf32, #tpu.memory_space<vmem>>, vector<8x128xf32>
    tpu.vector_store %arg3[%c0_7, %c0_8], %14 {strides = array<i32>} : memref<8x128xf32, #tpu.memory_space<vmem>>, vector<8x128xf32>,
    return
  }
  func.func @transform_0(%arg0: i32) -> (i32, i32) {
    %c0_i32 = arith.constant 0 : i32
    %c0_i32_0 = arith.constant 0 : i32
    return %arg0, %c0_i32 : i32, i32
  }
  func.func @transform_1(%arg0: i32) -> (i32, i32) {
    %c0_i32 = arith.constant 0 : i32
    %c0_i32_0 = arith.constant 0 : i32
    %c0_i32_1 = arith.constant 0 : i32
    return %c0_i32, %c0_i32_0 : i32, i32
  }
  func.func @transform_2(%arg0: i32) -> (i32, i32) {
    %c0_i32 = arith.constant 0 : i32
    %c0_i32_0 = arith.constant 0 : i32
    return %arg0, %c0_i32 : i32, i32
  }
}

</mosaic_0001>

<llo_original>
// kernel: tpu_custom_call.1
$region0: #{tpu_custom_call.1}
  #allocation0 [shape = 'u32[]', space=smem, size = 0x4, offset = 0x4, fixed_abs, tag = 'smem constant byte address 0x4 - core index']
  #allocation1 [shape = 'u32[144,128]{1,0:T(1,128)}', space=vmem, size = 0x12000, scoped, tag = 'internal scratch']
  %s0 = inlined_call_operand.vmem [shape: f32[32,2], index: 0, kind: input, shape index: {}]
  %s1 = inlined_call_operand.vmem [shape: f32[8,128], index: 1, kind: input, shape index: {}]
  %s2 = inlined_call_operand.hbm [shape: f32[32,128], index: 2, kind: output, shape index: {}]
  %s3 = sld [smem:[#allocation0]]
  $region41: #{tpu_custom_call.1} parent=0
    _
  %s5 = ssub.s32 1, %s3
  %s6 = scalar_select 0, %s5, %s3
  $region1: #{tpu_custom_call.1} parent=0
    #allocation2 [shape = 'u8[8192]{0}', space=vmem, size = 0x2000, scoped, tag = 'output window, operand 0']
    #allocation3 [shape = 's32[2]{0}', space=sflag, size = 0x8, scoped, tag = 'scoped memory for tpu_custom_call.1']
    %7 = vsyncpa [#allocation3], 0
    %s8 = scalar_lea.sflag [#allocation3], 1
    %9 = vsyncpa %s8, 0
    loop: start=0, step=1, limit=6
    $region2: #{tpu_custom_call.1} parent=1 // loop_pre_header
      _
    $region3: #{tpu_custom_call.1} parent=1 // loop_header
      %s11 = sphi 0, %s15
      %p12 = scmp.ge.s32.totalorder %s11, 6
      %s21 = sphi 0, %s23
      %s24 = sphi 0, %s21
      %s25 = sphi 0, %s24
      %s41 = sphi 0, %s25
      %s45 = sphi 0, %s45
      %s47 = sphi 0, %s45
      %s48 = sphi 0, %s47
      %s62 = sphi 0, %s48
      %s68 = sphi 0, %s70
      %s71 = sphi 0, %s68
      %s72 = sphi 0, %s71
      %s88 = sphi 0, %s72
    $region4: #{tpu_custom_call.1} parent=1 // loop_header_branch
      %14 = sbr.rel (%p12) target = $region8
    $region5: #{tpu_custom_call.1} parent=1 // loop_body
      %s16 = ssub.s32 %s11, 1
      %s17 = ssub.s32 %s11, 2
      %s18 = sadd.s32 %s11, 1
      %s19 = ssub.s32 %s11, %s18
      %p20 = scmp.eq.s32.totalorder %s19, 0
      %s22 = sadd.s32 %s21, 1
      %s23 = scalar_select %p20, %s21, %s22
      %p26 = pneg %p20
      %p27 = scmp.eq.s32.totalorder %s11, 3
      %p28 = por %p26, %p27
      %p29 = scmp.ne.s32.totalorder %s21, %s24
      %p30 = scmp.eq.s32.totalorder %s11, 0
      %p31 = por %p29, %p30
      %p32 = scmp.ne.s32.totalorder %s21, %s24
      %p33 = scmp.eq.s32.totalorder %s16, 3
      %p34 = por %p32, %p33
      %p35 = scmp.ne.s32.totalorder %s24, %s25
      %p36 = scmp.eq.s32.totalorder %s16, 0
      %p37 = por %p35, %p36
      %p38 = scmp.ne.s32.totalorder %s24, %s25
      %p39 = scmp.eq.s32.totalorder %s17, 3
      %p40 = por %p38, %p39
      %p42 = scmp.ne.s32.totalorder %s25, %s41
      %p43 = scmp.eq.s32.totalorder %s17, 0
      %p44 = por %p42, %p43
      %s46 = sadd.s32 %s45, 1
      %p49 = scmp.eq.s32.totalorder %s11, 3
      %p50 = scmp.ne.s32.totalorder %s45, %s47
      %p51 = scmp.eq.s32.totalorder %s11, 0
      %p52 = por %p50, %p51
      %p53 = scmp.ne.s32.totalorder %s45, %s47
      %p54 = scmp.eq.s32.totalorder %s16, 3
      %p55 = por %p53, %p54
      %p56 = scmp.ne.s32.totalorder %s47, %s48
      %p57 = scmp.eq.s32.totalorder %s16, 0
      %p58 = por %p56, %p57
      %p59 = scmp.ne.s32.totalorder %s47, %s48
      %p60 = scmp.eq.s32.totalorder %s17, 3
      %p61 = por %p59, %p60
      %p63 = scmp.ne.s32.totalorder %s48, %s62
      %p64 = scmp.eq.s32.totalorder %s17, 0
      %p65 = por %p63, %p64
      %s66 = ssub.s32 %s11, %s18
      %p67 = scmp.eq.s32.totalorder %s66, 0
      %s69 = sadd.s32 %s68, 1
      %s70 = scalar_select %p67, %s68, %s69
      %p73 = pneg %p67
      %p74 = scmp.eq.s32.totalorder %s11, 3
      %p75 = por %p73, %p74
      %p76 = scmp.ne.s32.totalorder %s68, %s71
      %p77 = scmp.eq.s32.totalorder %s11, 0
      %p78 = por %p76, %p77
      %p79 = scmp.ne.s32.totalorder %s68, %s71
      %p80 = scmp.eq.s32.totalorder %s16, 3
      %p81 = por %p79, %p80
      %p82 = scmp.ne.s32.totalorder %s71, %s72
      %p83 = scmp.eq.s32.totalorder %s16, 0
      %p84 = por %p82, %p83
      %p85 = scmp.ne.s32.totalorder %s71, %s72
      %p86 = scmp.eq.s32.totalorder %s17, 3
      %p87 = por %p85, %p86
      %p89 = scmp.ne.s32.totalorder %s72, %s88
      %p90 = scmp.eq.s32.totalorder %s17, 0
      %p91 = por %p89, %p90
      %p92 = scmp.le.s32.totalorder 1, %s11
      %p93 = scmp.lt.s32.totalorder %s11, 5
      %p94 = pnand %p92, %p93
      %p95 = pneg %p94
      // Predicated region
      $region9: #{tpu_custom_call.1} parent=5 // pred_check
        _
      $region10: #{tpu_custom_call.1} parent=5 // pred_check_branch
        %97 = sbr.rel (%p94) target = $region12
      $region11: #{tpu_custom_call.1} parent=5 // pred_region
        %s98 = ssub.s32 %s11, 1
        // Predicated region
        $region13: #{tpu_custom_call.1} parent=11 // pred_check
          %p99 = pneg %p58
        $region14: #{tpu_custom_call.1} parent=11 // pred_check_branch
          %101 = sbr.rel (%p99) target = $region16
        $region15: #{tpu_custom_call.1} parent=11 // pred_region
          _
        $region16: #{tpu_custom_call.1} parent=11 // pred_fallthru
          _
      $region12: #{tpu_custom_call.1} parent=5 // pred_fallthru
        _
      %p102 = scmp.lt.s32.totalorder %s11, 4
      // Predicated region
      $region17: #{tpu_custom_call.1} parent=5 // pred_check
        %p103 = pneg %p102
      $region18: #{tpu_custom_call.1} parent=5 // pred_check_branch
        %105 = sbr.rel (%p103) target = $region20
      $region19: #{tpu_custom_call.1} parent=5 // pred_region
        // Predicated region
        $region21: #{tpu_custom_call.1} parent=19 // pred_check
          %p106 = pneg %p31
        $region22: #{tpu_custom_call.1} parent=19 // pred_check_branch
          %108 = sbr.rel (%p106) target = $region24
        $region23: #{tpu_custom_call.1} parent=19 // pred_region
          %p109 = scmp.lt.s32.totalorder %s11, 3
          %s110 = scalar_select %p109, %s11, 3
          %s111 = smul.addr %s110, 8
          %s112 = scalar_lea.vmem %s0, %s111
        $region24: #{tpu_custom_call.1} parent=19 // pred_fallthru
          _
      $region20: #{tpu_custom_call.1} parent=5 // pred_fallthru
        _
      %p113 = scmp.le.s32.totalorder 1, %s11
      %p114 = scmp.lt.s32.totalorder %s11, 5
      %p115 = pnand %p113, %p114
      %p116 = pneg %p115
      // Predicated region
      $region25: #{tpu_custom_call.1} parent=5 // pred_check
        _
      $region26: #{tpu_custom_call.1} parent=5 // pred_check_branch
        %118 = sbr.rel (%p115) target = $region28
      $region27: #{tpu_custom_call.1} parent=5 // pred_region
        %s119 = ssub.s32 %s11, 1
        %p120 = scmp.lt.s32.totalorder %s16, 3
        %s121 = scalar_select %p120, %s16, 3
        %s122 = smul.addr %s121, 8
        %s123 = scalar_lea.vmem %s0, %s122
        %p124 = pneg %p37
        %p125 = pneg %p34
        %p126 = pneg %p58
        %p127 = pneg %p55
        %p128 = pneg %p84
        %p129 = pneg %p81
        %s130 = sand.u32 %s71, 1
        %s131 = scalar_lea.sflag [#allocation3], %s130
        %s132 = sand.u32 %s71, 1
        %s133 = smul.addr %s132, 8
        %s134 = scalar_lea.vmem [#allocation2], %s133
        %p135 = scmp.lt.s32.totalorder %s16, 3
        %s136 = scalar_select %p135, %s16, 3
        %s137 = smul.addr %s136, 8
        %s138 = scalar_lea.vmem %s0, %s137
        %v139 = vld [vmem:[%s138] sm:$0xff]
        %v140 = vld [vmem:[%s1] sm:$0x1]
        %v141 = vld [vmem:[%s1 + $0x1] sm:$0x1]
        %v142 = vld [vmem:[%s1 + $0x2] sm:$0x1]
        %144 = vset.pattern.permute.xlu0 0
        %145 = vperm.xlu0 %144, %v139
        %v146 = vpop.permute.xlu0 %145
        %v148 = vlaneseq
        %v149 = vshrl.u32 %v148, 7
        %v150 = vsub.s32 0, %v149
        %v151 = vrot.slane %v140, %v150
        %v152 = vmul.f32 %v146, %v151
        %153 = vset.pattern.permute.xlu0 1
        %154 = vperm.xlu0 %153, %v139
        %v155 = vpop.permute.xlu0 %154
        %v157 = vlaneseq
        %v158 = vshrl.u32 %v157, 7
        %v159 = vsub.s32 0, %v158
        %v160 = vrot.slane %v141, %v159
        %v161 = vmul.f32 %v155, %v160
        %v162 = vadd.f32 %v152, %v161
        %v163 = vlaneseq
        %v164 = vshrl.u32 %v163, 7
        %v165 = vsub.s32 0, %v164
        %v166 = vrot.slane %v142, %v165
        %v167 = vadd.f32 %v162, %v166
        %v168 = vand.u32 2147483647, %v167
        %vm169 = vcmp.le.f32.partialorder %v168, 0.7853982
        %vm170 = vcmp.lt.s32.totalorder %v167, 0
        %v171 = vand.u32 %v167, 2139095040
        %v172 = vshrl.u32 %v171, 23
        %v173 = vsub.s32 %v172, 127
        %v174 = vand.u32 2147483647, %v167
        %v175 = vand.u32 %v174, 8388607
        %v176 = vor.u32 %v175, 8388608
        %v177 = vsub.s32 0, %v176
        %v178 = vadd.s32 %v173, 1
        %vm179 = vcmp.gt.s32.totalorder %v178, 0
        %v180 = vsel %vm179, %v178, 0
        %v181 = vshrl.u32 %v180, 5
        %v182 = vand.u32 %v180, 31
        %v183 = vsub.s32 32, %v182
        %v184 = vshrl.u32 683565275, %v183
        %v185 = vshll.u32 683565275, %v182
        %v186 = vshrl.u32 2475754826, %v183
        %v187 = vor.u32 %v185, %v186
        %v188 = vshll.u32 2475754826, %v182
        %v189 = vshrl.u32 2131351028, %v183
        %v190 = vor.u32 %v188, %v189
        %v191 = vshll.u32 2131351028, %v182
        %v192 = vshrl.u32 2102212464, %v183
        %v193 = vor.u32 %v191, %v192
        %v194 = vshll.u32 2102212464, %v182
        %v195 = vshrl.u32 920167782, %v183
        %v196 = vor.u32 %v194, %v195
        %v197 = vshll.u32 920167782, %v182
        %v198 = vshrl.u32 1326507024, %v183
        %v199 = vor.u32 %v197, %v198
        %vm200 = vcmp.lt.s32.totalorder %v181, 1
        %vm201 = vcmp.lt.s32.totalorder %v181, 2
        %vm202 = vcmp.lt.s32.totalorder %v181, 3
        %vm203 = vcmp.lt.s32.totalorder %v181, 4
        %v204 = vsel %vm200, %v184, %v187
        %v205 = vsel %vm203, %v193, 2102212464
        %v206 = vsel %vm202, %v190, %v205
        %v207 = vsel %vm201, %v204, %v206
        %v208 = vsel %vm200, %v187, %v190
        %v209 = vsel %vm203, %v196, 920167782
        %v210 = vsel %vm202, %v193, %v209
        %v211 = vsel %vm201, %v208, %v210
        %v212 = vsel %vm200, %v190, %v193
        %v213 = vsel %vm203, %v199, 1326507024
        %v214 = vsel %vm202, %v196, %v213
        %v215 = vsel %vm201, %v212, %v214
        %v216 = vshll.u32 %v176, 8
        %v217 = vmul.u32.u64.compose %v216, %v215
        %v218 = vextract.low.u32 %v217
        %v219 = vextract.high.u32 %v217
        %v220 = vmul.u32.u64.compose %v216, %v211
        %v221 = vextract.low.u32 %v220
        %v222 = vextract.high.u32 %v220
        %v223 = vmul.u32 %v216, %v207
        %v224 = vadd.s32 %v219, %v221
        %vm225 = vc.u32 %v219, %v221
        %v226 = vadd.s32 %v222, 1
        %v227 = vsel %vm225, %v226, %v222
        %v228 = vadd.s32 %v223, %v227
        %v229 = vadd.s32 %v228, 536870912
        %v230 = vshrl.u32 %v229, 30
        %v231 = vshll.u32 %v230, 30
        %v232 = vsub.s32 %v228, %v231
        %vm233 = vcmp.lt.s32.totalorder %v232, 0
        %v234 = vsub.s32 0, %v232
        %v235 = vsel %vm233, %v234, %v232
        %v236 = vclz %v235
        %v237 = vsub.s32 %v236, 2
        %vm238 = vcmp.gt.s32.totalorder 0, %v237
        %v239 = vsel %vm238, 0, %v237
        %v240 = vsub.s32 32, %v239
        %v241 = vshll.u32 %v232, %v239
        %v242 = vshrl.u32 %v224, %v240
        %v243 = vor.u32 %v241, %v242
        %v244 = vsub.s32 4294967266, %v239
        %v245 = vadd.s32 %v244, 127
        %v246 = vshll.u32 %v245, 23
        %v247 = vor.u32 4788187, %v246
        %v248 = vand.u32 2147483647, %v247
        %v250 = vcvt.s32.f32 %v243
        %v251 = vmul.f32 %v250, %v248
        %v252 = vxor.u32 %v251, 2147483648
        %v253 = vsel %vm170, %v252, %v251
        %v254 = vsub.s32 4, %v230
        %v255 = vsel %vm170, %v254, %v230
        %v256 = vsel %vm169, %v167, %v253
        %v257 = vsel %vm169, 0, %v255
        %v258 = vcosq.f32.pop %v256
        %v259 = vsinq.f32.pop %v256
        %vm260 = vweird.f32 %v167
        %v261 = vadd.s32 %v257, 3
        %v262 = vand.u32 %v261, 3
        %vm263 = vcmp.lt.s32.totalorder %v262, 2
        %vm264 = vcmp.eq.s32.totalorder %v262, 0
        %v265 = vxor.u32 %v259, 2147483648
        %v266 = vsel %vm264, %v258, %v265
        %vm267 = vcmp.eq.s32.totalorder %v262, 2
        %v268 = vxor.u32 %v258, 2147483648
        %v269 = vsel %vm267, %v268, %v259
        %v270 = vsel %vm263, %v266, %v269
        %v271 = vsel %vm260, nan, %v270
        %272 = vst [vmem:[%s134] sm:$0xff] %v271
        %s273 = sand.u32 %s71, 1
        %s274 = scalar_lea.sflag [#allocation3], %s273
        %s275 = sand.u32 %s71, 1
        %s276 = smul.addr %s275, 8
        %s277 = scalar_lea.vmem [#allocation2], %s276
        // Predicated region
        $region29: #{tpu_custom_call.1} parent=27 // pred_check
          %p278 = pneg %p81
        $region30: #{tpu_custom_call.1} parent=27 // pred_check_branch
          %280 = sbr.rel (%p278) target = $region32
        $region31: #{tpu_custom_call.1} parent=27 // pred_region
          %s282 = ssub.s32 128, 128
          %283 = vsyncadd %s274, %s282
          %s284 = smul.addr %s16, 128
          %s285 = scalar_lea.hbm %s2, %s284
          %s287 = sshll.u32 %s277, 4
          %s288 = int_to_ptr.vmem [resolvable:$true] %s287
          %290 = dma.vmem_to_hbm [thread:$0]  %s288, 128, %s285, %s274
        $region32: #{tpu_custom_call.1} parent=27 // pred_fallthru
          _
      $region28: #{tpu_custom_call.1} parent=5 // pred_fallthru
        _
      %p291 = scmp.le.s32.totalorder 2, %s11
      // Predicated region
      $region33: #{tpu_custom_call.1} parent=5 // pred_check
        %p292 = pneg %p291
      $region34: #{tpu_custom_call.1} parent=5 // pred_check_branch
        %294 = sbr.rel (%p292) target = $region36
      $region35: #{tpu_custom_call.1} parent=5 // pred_region
        %s295 = ssub.s32 %s11, 2
        // Predicated region
        $region37: #{tpu_custom_call.1} parent=35 // pred_check
          %p296 = pneg %p87
        $region38: #{tpu_custom_call.1} parent=35 // pred_check_branch
          %298 = sbr.rel (%p296) target = $region40
        $region39: #{tpu_custom_call.1} parent=35 // pred_region
          %s299 = sand.u32 %s72, 1
          %s300 = scalar_lea.sflag [#allocation3], %s299
          %s301 = sand.u32 %s72, 1
          %s302 = smul.addr %s301, 8
          %s303 = scalar_lea.vmem [#allocation2], %s302
          %304 = dma.done %s300, 128
        $region40: #{tpu_custom_call.1} parent=35 // pred_fallthru
          _
      $region36: #{tpu_custom_call.1} parent=5 // pred_fallthru
        _
    $region6: #{tpu_custom_call.1} parent=1 // loop_footer
      %s15 = sadd.s32 1, %s11
    $region7: #{tpu_custom_call.1} parent=1 // loop_footer_branch
      %10 = sbr.rel target = $region3
    $region8: #{tpu_custom_call.1} parent=1 // loop_exit
      _
    %305 = vsyncpa [#allocation3], 1
    %s306 = scalar_lea.sflag [#allocation3], 1
    %307 = vsyncpa %s306, 1

</llo_original>
